<compile_context>
chip_gen: v7x
topology: tpu7x:2x2x1
jax: 0.10.0
libtpu: 0.0.40
codegen_flags: <defaults>
</compile_context>

<pallas_src>
from types import SimpleNamespace

import numpy as np
import jax
import jax.numpy as jnp
from jax.experimental import pallas as pl
from jax.experimental.pallas import tpu as pltpu

# Synthetic model sizes (the checkpointed model is not available; shapes chosen
# small and consistent with an encoder producing (syntax, content) of size H
# each, so decoder hidden = cat(syntax, content) = 2*H).
V = 32              # vocab size
E = 32              # embedding dim
H = 32              # per-stream encoder hidden
DH = 2 * H          # decoder hidden = cat(syntax, content)
DH_PAD = 128        # decoder hidden padded to one full lane width
V_PAD = 128         # vocab padded to one full lane width (lane-dense output)
XDIM = 128          # augmented decoder input: [emb(32) | hid(64) | 1 | 0-pad] -> 128 lanes
ROWS = 8            # beam rows per decoder call (fp32 sublane tile)
BEAM_SIZE = 3
SLOTS = 512         # device-resident hidden-state slots (512*128*4 B = 256 KiB)


def _vmem_spec():
    # whole-array block resident in VMEM (shapes are tiny; no grid/pipelining needed)
    return pl.BlockSpec(memory_space=pltpu.MemorySpace.VMEM)


# ----------------------------- Pallas kernels ------------------------------ #

def _encoder_kernel(src_emb_ref, w_syncon_ref, w_c_ref, b_dec_ref,
                    enc_ref, bias1_ref):
    # src_emb: [L, E] -> mean pool -> single fused projection -> enc [1, DH]
    # Also emit the constant decoder term: bias1 = enc @ Wc + b_dec  [1, DH]
    pooled = jnp.mean(src_emb_ref[...], axis=0, keepdims=True)                     # [1, E]
    enc = jnp.dot(pooled, w_syncon_ref[...], preferred_element_type=jnp.float32)   # [1, DH]
    enc_ref[...] = enc
    bias1_ref[...] = (jnp.dot(enc, w_c_ref[...], preferred_element_type=jnp.float32)
                      + b_dec_ref[...])


def _decoder_kernel(x_ref, w1_ref, w_out_ref, probs_ref, hid_ref):
    # Batched decoder step for up to ROWS beams, everything 128-lane aligned.
    #   x     : [ROWS, 128] = [emb(32) | hidden(64) | 1 | 0-pad]     (built in the jit)
    #   w1    : [128, 128]  = [We ; Wh ; (enc@Wc + b_dec) ; 0-pad] (cols >= DH are zero)
    #   w_out : [128, 128]  rows 0..DH-1 = Wout (vocab-padded with 0),
    #                       row DH = [b_out | -1e30 sentinel], rows > DH = 0
    h0 = jnp.tanh(jnp.dot(x_ref[...], w1_ref[...],
                          preferred_element_type=jnp.float32))                     # [ROWS, 128]
    # constant-1 lane at column DH carries the folded output bias
    col = jax.lax.broadcasted_iota(jnp.int32, h0.shape, 1)
    h = jnp.where(col == DH, 1.0, h0)
    logits = jnp.dot(h, w_out_ref[...], preferred_element_type=jnp.float32)        # [ROWS, 128]
    m = jnp.max(logits, axis=-1, keepdims=True)
    e = jnp.exp(logits - m)                                                        # pad lanes -> 0
    inv = pl.reciprocal(jnp.sum(e, axis=-1, keepdims=True), approx=True)           # EUP slot
    probs_ref[...] = e * inv                                                       # softmax(dim=1)
    hid_ref[...] = h                                                               # lane-dense store


# ------------------------------ jitted wrappers ----------------------------- #

@jax.jit
def encode(src_ids, embedding, w_syncon, w_c, b_dec, w_ecat):
    """Embedding lookup + fused encoder kernel + build the fused decoder weight."""
    src_emb = jnp.take(embedding, src_ids, axis=0)                                 # [L, E]
    enc, bias1 = pl.pallas_call(
        _encoder_kernel,
        out_shape=(jax.ShapeDtypeStruct((1, DH), jnp.float32),
                   jax.ShapeDtypeStruct((1, DH), jnp.float32)),
        in_specs=[_vmem_spec()] * 4,
        out_specs=(_vmem_spec(), _vmem_spec()),
    )(src_emb, w_syncon, w_c, b_dec)
    # w1_full [128,128]: rows 0..E+DH-1 = [We ; Wh], row E+DH = folded enc term + bias,
    # remaining rows / columns >= DH are zero.
    w1 = jnp.zeros((XDIM, DH_PAD), jnp.float32)
    w1 = w1.at[:E + DH, :DH].set(w_ecat)
    w1 = w1.at[E + DH, :DH].set(bias1[0])
    # root hidden padded to the 128-lane hidden-slot layout
    enc_pad = jnp.zeros((1, DH_PAD), jnp.float32).at[:, :DH].set(enc)
    return enc_pad, w1


@jax.jit
def decoder_step(tokens, parent_slots, out_slots, hid_buf, embedding, w1_full, w_out_pad):
    """One batched decoder step.

    All state stays on device: embedding lookup, parent-hidden gather, x
    assembly, the Pallas kernel, top-k, and the hidden-slot scatter all run in
    a single XLA dispatch.  Only `vals`/`idx` (3x8 each) are fetched by the host.
    """
    emb = jnp.take(embedding, tokens, axis=0)                                      # [ROWS, E]
    ph = jnp.take(hid_buf, parent_slots, axis=0)                                   # [ROWS, 128]
    x = jnp.zeros((ROWS, XDIM), jnp.float32)
    x = x.at[:, :E].set(emb)
    x = x.at[:, E:E + DH].set(ph[:, :DH])
    x = x.at[:, E + DH].set(1.0)                                                   # const-1 column
    probs, hid = pl.pallas_call(
        _decoder_kernel,
        out_shape=(jax.ShapeDtypeStruct((ROWS, V_PAD), jnp.float32),
                   jax.ShapeDtypeStruct((ROWS, DH_PAD), jnp.float32)),
        in_specs=[_vmem_spec()] * 3,
        out_specs=(_vmem_spec(), _vmem_spec()),
    )(x, w1_full, w_out_pad)
    vals, idx = jax.lax.top_k(probs[:, :V], BEAM_SIZE)                             # pads excluded
    new_buf = hid_buf.at[out_slots].set(hid)                                       # stays on device
    return vals, idx, new_buf


# ------------------------------- beam search -------------------------------- #

class Node(object):
    def __init__(self, hidden, previous_node, decoder_input, log_prob, length):
        self.hidden = hidden                 # int: slot index into device hid_buf
        self.previous_node = previous_node
        self.decoder_input = decoder_input   # python int (token id)
        self.log_prob = log_prob             # python float
        self.length = length


def translate_data(sentence, src_field):
    tokens = [src_field.init_token] + list(sentence) + [src_field.eos_token]
    src_tensor = jnp.array(tokens, dtype=jnp.int32)[:, None]   # [L, 1]  (seq, batch)
    src_len = len(tokens)
    return src_tensor, src_len


def pack_params(params):
    """Precompute fused / padded weights once."""
    packed = dict(params)
    packed["w_syncon"] = jnp.concatenate([params["w_syn"], params["w_con"]], axis=1)   # [E, DH]
    packed["w_ecat"] = jnp.concatenate([params["w_e"], params["w_h"]], axis=0)         # [E+DH, DH]
    # w_out padded to [128, 128]; row DH carries b_out and the -1e30 vocab-pad sentinel
    w_out_pad = jnp.zeros((DH_PAD, V_PAD), jnp.float32)
    w_out_pad = w_out_pad.at[:DH, :V].set(params["w_out"])
    w_out_pad = w_out_pad.at[DH, :].set(jnp.full((V_PAD,), -1e30, jnp.float32))
    w_out_pad = w_out_pad.at[DH, :V].set(params["b_out"][0])
    packed["w_out_pad"] = w_out_pad
    return packed


class BeamSearch:
    """JAX/Pallas port of Beam_Search.forward."""

    def __init__(self, params):
        self.params = params
        self.packed = pack_params(params)

    def forward(self, src, src_field, max_len=30):
        sos_idx = src_field.init_token
        eos_idx = src_field.eos_token
        src_tensor, _src_len = translate_data(src, src_field)
        batch_size = src_tensor.shape[1]     # always 1 (mirrors the reference)
        max_len = len(src) + 5

        all_tokens = [[eos_idx] * max_len for _ in range(batch_size)]
        all_scores = [[0.0] * max_len for _ in range(batch_size)]

        p = self.packed
        # --- encoder (Pallas kernel): embed + pool + fused projection; also
        #     builds the fused per-sentence decoder weight (enc term folded in).
        enc_pad, w1_full = encode(src_tensor[:, 0], p["embedding"], p["w_syncon"],
                                  p["w_c"], p["b_dec"], p["w_ecat"])
        # Device-resident hidden-state buffer; slot 0 = encoder hidden (batch_size == 1).
        hid_buf = jnp.zeros((SLOTS, DH_PAD), jnp.float32).at[0:1].set(enc_pad)
        next_slot = batch_size

        embedding = p["embedding"]
        w_out_pad = p["w_out_pad"]

        beam_size = BEAM_SIZE
        for batch_idx in range(batch_size):
            root = Node(hidden=batch_idx, previous_node=None,
                        decoder_input=sos_idx, log_prob=1.0, length=1)
            q = [root]
            end_nodes = []
            while q:
                if len(end_nodes) >= beam_size:
                    break
                count = len(q)
                # Pop nodes for this round; stop at the first eos/max_len node
                # (exactly like the original's `break` inside the for loop).
                decode_nodes = []
                for _ in range(count):
                    node = q.pop(0)
                    if node.decoder_input == eos_idx or node.length >= max_len:
                        end_nodes.append(node)
                        break
                    decode_nodes.append(node)

                # One batched decoder call per <=ROWS chunk; only top-k comes to host.
                results = []
                for start in range(0, len(decode_nodes), ROWS):
                    chunk = decode_nodes[start:start + ROWS]
                    if next_slot + ROWS > SLOTS:
                        raise RuntimeError("hidden-state slot buffer exhausted; raise SLOTS")
                    tokens = np.zeros((ROWS,), np.int32)
                    parents = np.zeros((ROWS,), np.int32)
                    outs = (next_slot + np.arange(ROWS)).astype(np.int32)
                    for r, nd in enumerate(chunk):
                        tokens[r] = nd.decoder_input
                        parents[r] = nd.hidden
                    vals, idx, hid_buf = decoder_step(tokens, parents, outs, hid_buf,
                                                      embedding, w1_full, w_out_pad)
                    vals_np, idx_np = jax.device_get((vals, idx))   # 3x8 floats + 3x8 ints
                    for r, _nd in enumerate(chunk):
                        results.append((vals_np[r], idx_np[r], int(outs[r])))
                    next_slot += ROWS

                candidates = []
                for nd, (v3, i3, slot) in zip(decode_nodes, results):
                    for i in range(beam_size):
                        prob = float(v3[i]) * nd.log_prob
                        candidates.append(
                            (prob, Node(hidden=slot, previous_node=nd,
                                        decoder_input=int(i3[i]),
                                        log_prob=prob, length=nd.length + 1)))
                if not candidates:
                    continue
                candidates.sort(key=lambda t: t[0], reverse=True)
                for i in range(min(beam_size, len(candidates))):
                    q.append(candidates[i][1])

            if not end_nodes:
                end_nodes = [root]
            max_node = max(end_nodes, key=lambda n: n.log_prob)
            _token_idxs, _token_scores = [], []
            while max_node is not None:
                _token_idxs = [int(max_node.decoder_input)] + _token_idxs
                _token_scores = [float(max_node.log_prob)] + _token_scores
                max_node = max_node.previous_node
            token_len = min(len(_token_idxs), max_len)
            for j in range(token_len):
                all_tokens[batch_idx][j] = _token_idxs[j]
                all_scores[batch_idx][j] = _token_scores[j]

        # matches `all_tokens.squeeze().tolist()` for batch_size == 1
        if batch_size == 1:
            return all_tokens[0]
        return all_tokens


# ----------------------------------- main ----------------------------------- #

def make_params(key):
    ks = jax.random.split(key, 8)
    scale = 0.1
    return {
        "embedding": jax.random.normal(ks[0], (V, E), jnp.float32) * scale,
        "w_syn": jax.random.normal(ks[1], (E, H), jnp.float32) * scale,
        "w_con": jax.random.normal(ks[2], (E, H), jnp.float32) * scale,
        "w_e": jax.random.normal(ks[3], (E, DH), jnp.float32) * scale,
        "w_h": jax.random.normal(ks[4], (DH, DH), jnp.float32) * scale,
        "w_c": jax.random.normal(ks[5], (DH, DH), jnp.float32) * scale,
        "b_dec": jnp.zeros((1, DH), jnp.float32),
        "w_out": jax.random.normal(ks[6], (DH, V), jnp.float32) * scale,
        "b_out": jnp.zeros((1, V), jnp.float32),
    }


if __name__ == "__main__":
    key = jax.random.PRNGKey(0)
    params = make_params(key)

    src_field = SimpleNamespace(init_token=1, eos_token=2)
    # deterministic small source sentence (token ids), length 6
    src = [int(t) for t in
           jax.random.randint(jax.random.PRNGKey(1), (6,), 3, V)]

    beam = BeamSearch(params)
    p = beam.packed

    # Exercise the kernels once directly and block on device results.
    src_tensor, _ = translate_data(src, src_field)
    enc_pad, w1_full = encode(src_tensor[:, 0], p["embedding"], p["w_syncon"],
                              p["w_c"], p["b_dec"], p["w_ecat"])
    hid_buf = jnp.zeros((SLOTS, DH_PAD), jnp.float32).at[0:1].set(enc_pad)
    tokens0 = np.full((ROWS,), src_field.init_token, np.int32)
    parents0 = np.zeros((ROWS,), np.int32)
    outs0 = (1 + np.arange(ROWS)).astype(np.int32)
    vals, idx, hid_buf = decoder_step(tokens0, parents0, outs0, hid_buf,
                                      p["embedding"], w1_full, p["w_out_pad"])
    jax.block_until_ready((enc_pad, w1_full, vals, idx, hid_buf))

    out_tokens = beam.forward(src, src_field)
    jax.block_until_ready(jnp.asarray(out_tokens))

    assert len(out_tokens) == len(src) + 5
    print("KERNEL_OK")
</pallas_src>

<mosaic_0001>
module attributes {stable_mosaic.version = 11 : i64} {
  func.func @_encoder_kernel(%arg0: memref<8x32xf32, #tpu.memory_space<vmem>>, %arg1: memref<32x64xf32, #tpu.memory_space<vmem>>, %arg2: memref<64x64xf32, #tpu.memory_space<vmem>>, %arg3: memref<1x64xf32, #tpu.memory_space<vmem>>, %arg4: memref<1x64xf32, #tpu.memory_space<vmem>>, %arg5: memref<1x64xf32, #tpu.memory_space<vmem>>) attributes {dimension_semantics = [], scalar_prefetch = 0 : i64, scratch_operands = 0 : i64, tpu.core_type = #tpu.core_type<tc>} {
    %c0 = arith.constant 0 : index
    %c0_0 = arith.constant 0 : index
    %0 = vector.load %arg0[%c0, %c0_0] : memref<8x32xf32, #tpu.memory_space<vmem>>, vector<8x32xf32>
    %cst = arith.constant dense<0.000000e+00> : vector<32xf32>
    %1 = vector.multi_reduction <add>, %0, %cst [0] : vector<8x32xf32> to vector<32xf32>
    %2 = vector.shape_cast %1 : vector<32xf32> to vector<1x32xf32>
    %cst_1 = arith.constant 8.000000e+00 : f32
    %3 = vector.broadcast %cst_1 : f32 to vector<1x32xf32>
    %4 = arith.divf %2, %3 : vector<1x32xf32>
    %c0_2 = arith.constant 0 : index
    %c0_3 = arith.constant 0 : index
    %5 = vector.load %arg1[%c0_2, %c0_3] : memref<32x64xf32, #tpu.memory_space<vmem>>, vector<32x64xf32>
    %cst_4 = arith.constant dense<0.000000e+00> : vector<1x64xf32>
    %6 = tpu.matmul %4, %5, %cst_4 {dimension_numbers = #tpu.dot_dimension_numbers<[1], [0], [0], [1], [0, 0, 1, 1], [], []>} : vector<1x32xf32>, vector<32x64xf32>, vector<1x64xf32> -> vector<1x64xf32>
    %c0_5 = arith.constant 0 : index
    %c0_6 = arith.constant 0 : index
    %7 = vector.load %arg4[%c0_5, %c0_6] : memref<1x64xf32, #tpu.memory_space<vmem>>, vector<1x64xf32>
    tpu.vector_store %arg4[%c0_5, %c0_6], %6 {strides = array<i32>} : memref<1x64xf32, #tpu.memory_space<vmem>>, vector<1x64xf32>,
    %c0_7 = arith.constant 0 : index
    %c0_8 = arith.constant 0 : index
    %8 = vector.load %arg2[%c0_7, %c0_8] : memref<64x64xf32, #tpu.memory_space<vmem>>, vector<64x64xf32>
    %cst_9 = arith.constant dense<0.000000e+00> : vector<1x64xf32>
    %9 = tpu.matmul %6, %8, %cst_9 {dimension_numbers = #tpu.dot_dimension_numbers<[1], [0], [0], [1], [0, 0, 1, 1], [], []>} : vector<1x64xf32>, vector<64x64xf32>, vector<1x64xf32> -> vector<1x64xf32>
    %c0_10 = arith.constant 0 : index
    %c0_11 = arith.constant 0 : index
    %10 = vector.load %arg3[%c0_10, %c0_11] : memref<1x64xf32, #tpu.memory_space<vmem>>, vector<1x64xf32>
    %11 = arith.addf %9, %10 : vector<1x64xf32>
    %c0_12 = arith.constant 0 : index
    %c0_13 = arith.constant 0 : index
    %12 = vector.load %arg5[%c0_12, %c0_13] : memref<1x64xf32, #tpu.memory_space<vmem>>, vector<1x64xf32>
    tpu.vector_store %arg5[%c0_12, %c0_13], %11 {strides = array<i32>} : memref<1x64xf32, #tpu.memory_space<vmem>>, vector<1x64xf32>,
    return
  }
}

</mosaic_0001>

<llo_original>
// kernel: encode.1
$region0: #{encode.1}
  #allocation0 [shape = 'u32[]', space=smem, size = 0x4, offset = 0x4, fixed_abs, tag = 'smem constant byte address 0x4 - core index']
  #allocation1 [shape = 'u32[144,128]{1,0:T(1,128)}', space=vmem, size = 0x12000, scoped, tag = 'internal scratch']
  %s0 = inlined_call_operand.vmem [shape: f32[8,32], index: 0, kind: input, shape index: {}]
  %s1 = inlined_call_operand.vmem [shape: f32[32,64], index: 1, kind: input, shape index: {}]
  %s2 = inlined_call_operand.vmem [shape: f32[64,64], index: 2, kind: input, shape index: {}]
  %s3 = inlined_call_operand.vmem [shape: f32[1,64], index: 3, kind: input, shape index: {}]
  %s4 = inlined_call_operand.vmem [shape: f32[1,64], index: 4, kind: output, shape index: {0}]
  %s5 = inlined_call_operand.vmem [shape: f32[1,64], index: 5, kind: output, shape index: {1}]
  %6 = xla_tuple %s4, %s5
  %s7 = sld [smem:[#allocation0]]
  $region34: #{encode.1} parent=0
    _
  %s9 = ssub.s32 1, %s7
  %s10 = scalar_select 0, %s9, %s7
  // Predicated region
  $region2: #{encode.1} parent=0 // pred_check
    _
  $region3: #{encode.1} parent=0 // pred_check_branch
    %12 = sbr.rel (0) target = $region5
  $region4: #{encode.1} parent=0 // pred_region
    _
  $region5: #{encode.1} parent=0 // pred_fallthru
    _
  // Predicated region
  $region6: #{encode.1} parent=0 // pred_check
    _
  $region7: #{encode.1} parent=0 // pred_check_branch
    %14 = sbr.rel (0) target = $region9
  $region8: #{encode.1} parent=0 // pred_region
    _
  $region9: #{encode.1} parent=0 // pred_fallthru
    _
  // Predicated region
  $region10: #{encode.1} parent=0 // pred_check
    _
  $region11: #{encode.1} parent=0 // pred_check_branch
    %16 = sbr.rel (0) target = $region13
  $region12: #{encode.1} parent=0 // pred_region
    _
  $region13: #{encode.1} parent=0 // pred_fallthru
    _
  // Predicated region
  $region14: #{encode.1} parent=0 // pred_check
    _
  $region15: #{encode.1} parent=0 // pred_check_branch
    %18 = sbr.rel (0) target = $region17
  $region16: #{encode.1} parent=0 // pred_region
    _
  $region17: #{encode.1} parent=0 // pred_fallthru
    _
  %v19 = vld [vmem:[%s0] sm:$0xff]
  %vm20 = vcmask 261120
  %v21 = vsel %vm20, %v19, 0.0
  %v22 = vrot.slane %v21, 4
  %v23 = vadd.f32 %v21, %v22
  %v24 = vrot.slane %v23, 2
  %v25 = vadd.f32 %v23, %v24
  %v26 = vrot.slane %v25, 1
  %v27 = vadd.f32 %v25, %v26
  %v28 = vrcp.pop 8.0
  %v29 = vmul.f32 %v27, %v28
  %v30 = vld [vmem:[%s1] sm:$0xff]
  %v31 = vld [vmem:[%s1 + $0x8] sm:$0xff]
  %v32 = vld [vmem:[%s1 + $0x10] sm:$0xff]
  %v33 = vld [vmem:[%s1 + $0x18] sm:$0xff]
  %v35 = vsel %vm20, %v29, 0
  %37 = vmatprep.subr.mxu0 0.0
  %38 = vmatpush1.msra.mxu0 %v30
  %39 = vmatprep.subr.mxu0 0.0
  %40 = vmatpush1.msra.mxu0 %v31
  %41 = vmatprep.subr.mxu0 0.0
  %42 = vmatpush1.msra.mxu0 %v32
  %43 = vmatprep.subr.mxu0 0.0
  %44 = vmatpush1.msra.mxu0 %v33
  %45 = vmatprep.subr.mxu0 0.0
  %46 = vmatpush1.msra.mxu0 0.0
  %47 = vmatprep.subr.mxu0 0.0
  %48 = vmatpush1.msra.mxu0 0.0
  %49 = vmatprep.subr.mxu0 0.0
  %50 = vmatpush1.msra.mxu0 0.0
  %51 = vmatprep.subr.mxu0 0.0
  %52 = vmatpush1.msra.mxu0 0.0
  %53 = vmatprep.subr.mxu0 0.0
  %54 = vmatpush1.msra.mxu0 0.0
  %55 = vmatprep.subr.mxu0 0.0
  %56 = vmatpush1.msra.mxu0 0.0
  %57 = vmatprep.subr.mxu0 0.0
  %58 = vmatpush1.msra.mxu0 0.0
  %59 = vmatprep.subr.mxu0 0.0
  %60 = vmatpush1.msra.mxu0 0.0
  %61 = vmatprep.subr.mxu0 0.0
  %62 = vmatpush1.msra.mxu0 0.0
  %63 = vmatprep.subr.mxu0 0.0
  %64 = vmatpush1.msra.mxu0 0.0
  %65 = vmatprep.subr.mxu0 0.0
  %66 = vmatpush1.msra.mxu0 0.0
  %67 = vmatprep.subr.mxu0 0.0
  %68 = vmatpush1.msra.mxu0 0.0
  %69 = vmatprep.subr.mxu0 0.0
  %70 = vmatpush1.msra.mxu0 0.0
  %71 = vmatprep.subr.mxu0 0.0
  %72 = vmatpush1.msra.mxu0 0.0
  %73 = vmatprep.subr.mxu0 0.0
  %74 = vmatpush1.msra.mxu0 0.0
  %75 = vmatprep.subr.mxu0 0.0
  %76 = vmatpush1.msra.mxu0 0.0
  %77 = vmatprep.subr.mxu0 0.0
  %78 = vmatpush1.msra.mxu0 0.0
  %79 = vmatprep.subr.mxu0 0.0
  %80 = vmatpush1.msra.mxu0 0.0
  %81 = vmatprep.subr.mxu0 0.0
  %82 = vmatpush1.msra.mxu0 0.0
  %83 = vmatprep.subr.mxu0 0.0
  %84 = vmatpush1.msra.mxu0 0.0
  %85 = vmatprep.subr.mxu0 0.0
  %86 = vmatpush1.msra.mxu0 0.0
  %87 = vmatprep.subr.mxu0 0.0
  %88 = vmatpush1.msra.mxu0 0.0
  %89 = vmatprep.subr.mxu0 0.0
  %90 = vmatpush1.msra.mxu0 0.0
  %91 = vmatprep.subr.mxu0 0.0
  %92 = vmatpush1.msra.mxu0 0.0
  %93 = vmatprep.subr.mxu0 0.0
  %94 = vmatpush1.msra.mxu0 0.0
  %95 = vmatprep.subr.mxu0 0.0
  %96 = vmatpush1.msra.mxu0 0.0
  %97 = vmatprep.subr.mxu0 0.0
  %98 = vmatpush1.msra.mxu0 0.0
  %99 = vmatprep.subr.mxu0 0.0
  %100 = vmatpush1.msra.mxu0 0.0
  %101 = vmatprep.mubr.f32.mxu0 0.0
  %102 = vmatmul.mubr.f32.gmra.mrb[0].mxu0 %v35
  %v103 = vpop.f32.mrb[0].mxu0
  %v104 = vadd.f32 0.0, %v103
  %v105 = vpop.f32.mrb[0].mxu0
  %106 = vdwg.mxu0
  %vm107 = vcmask 516096
  %108 = vst.msk [vmem:[%s4] sm:$0x1] %vm107, %v104
  %v109 = vld [vmem:[%s2] sm:$0xff]
  %v110 = vld [vmem:[%s2 + $0x8] sm:$0xff]
  %v111 = vld [vmem:[%s2 + $0x10] sm:$0xff]
  %v112 = vld [vmem:[%s2 + $0x18] sm:$0xff]
  %v113 = vld [vmem:[%s2 + $0x20] sm:$0xff]
  %v114 = vld [vmem:[%s2 + $0x28] sm:$0xff]
  %v115 = vld [vmem:[%s2 + $0x30] sm:$0xff]
  %v116 = vld [vmem:[%s2 + $0x38] sm:$0xff]
  %v117 = vld [vmem:[%s3] sm:$0x1]
  %vm118 = vcmask 523264
  %v120 = vsel %vm118, %v104, 0
  %122 = vmatprep.subr.mxu0 0.0
  %123 = vmatpush1.msra.mxu0 %v109
  %124 = vmatprep.subr.mxu0 0.0
  %125 = vmatpush1.msra.mxu0 %v110
  %126 = vmatprep.subr.mxu0 0.0
  %127 = vmatpush1.msra.mxu0 %v111
  %128 = vmatprep.subr.mxu0 0.0
  %129 = vmatpush1.msra.mxu0 %v112
  %130 = vmatprep.subr.mxu0 0.0
  %131 = vmatpush1.msra.mxu0 %v113
  %132 = vmatprep.subr.mxu0 0.0
  %133 = vmatpush1.msra.mxu0 %v114
  %134 = vmatprep.subr.mxu0 0.0
  %135 = vmatpush1.msra.mxu0 %v115
  %136 = vmatprep.subr.mxu0 0.0
  %137 = vmatpush1.msra.mxu0 %v116
  %138 = vmatprep.subr.mxu0 0.0
  %139 = vmatpush1.msra.mxu0 0.0
  %140 = vmatprep.subr.mxu0 0.0
  %141 = vmatpush1.msra.mxu0 0.0
  %142 = vmatprep.subr.mxu0 0.0
  %143 = vmatpush1.msra.mxu0 0.0
  %144 = vmatprep.subr.mxu0 0.0
  %145 = vmatpush1.msra.mxu0 0.0
  %146 = vmatprep.subr.mxu0 0.0
  %147 = vmatpush1.msra.mxu0 0.0
  %148 = vmatprep.subr.mxu0 0.0
  %149 = vmatpush1.msra.mxu0 0.0
  %150 = vmatprep.subr.mxu0 0.0
  %151 = vmatpush1.msra.mxu0 0.0
  %152 = vmatprep.subr.mxu0 0.0
  %153 = vmatpush1.msra.mxu0 0.0
  %154 = vmatprep.subr.mxu0 0.0
  %155 = vmatpush1.msra.mxu0 0.0
  %156 = vmatprep.subr.mxu0 0.0
  %157 = vmatpush1.msra.mxu0 0.0
  %158 = vmatprep.subr.mxu0 0.0
  %159 = vmatpush1.msra.mxu0 0.0
  %160 = vmatprep.subr.mxu0 0.0
  %161 = vmatpush1.msra.mxu0 0.0
  %162 = vmatprep.subr.mxu0 0.0
  %163 = vmatpush1.msra.mxu0 0.0
  %164 = vmatprep.subr.mxu0 0.0
  %165 = vmatpush1.msra.mxu0 0.0
  %166 = vmatprep.subr.mxu0 0.0
  %167 = vmatpush1.msra.mxu0 0.0
  %168 = vmatprep.subr.mxu0 0.0
  %169 = vmatpush1.msra.mxu0 0.0
  %170 = vmatprep.subr.mxu0 0.0
  %171 = vmatpush1.msra.mxu0 0.0
  %172 = vmatprep.subr.mxu0 0.0
  %173 = vmatpush1.msra.mxu0 0.0
  %174 = vmatprep.subr.mxu0 0.0
  %175 = vmatpush1.msra.mxu0 0.0
  %176 = vmatprep.subr.mxu0 0.0
  %177 = vmatpush1.msra.mxu0 0.0
  %178 = vmatprep.subr.mxu0 0.0
  %179 = vmatpush1.msra.mxu0 0.0
  %180 = vmatprep.subr.mxu0 0.0
  %181 = vmatpush1.msra.mxu0 0.0
  %182 = vmatprep.subr.mxu0 0.0
  %183 = vmatpush1.msra.mxu0 0.0
  %184 = vmatprep.subr.mxu0 0.0
  %185 = vmatpush1.msra.mxu0 0.0
  %186 = vmatprep.mubr.f32.mxu0 0.0
  %187 = vmatmul.mubr.f32.gmra.mrb[0].mxu0 %v120
  %v188 = vpop.f32.mrb[0].mxu0
  %v189 = vadd.f32 %v117, %v188
  %v190 = vpop.f32.mrb[0].mxu0
  %191 = vdwg.mxu0
  %192 = vst.msk [vmem:[%s5] sm:$0x1] %vm107, %v189
  // Predicated region
  $region18: #{encode.1} parent=0 // pred_check
    _
  $region19: #{encode.1} parent=0 // pred_check_branch
    %194 = sbr.rel (0) target = $region21
  $region20: #{encode.1} parent=0 // pred_region
    _
  $region21: #{encode.1} parent=0 // pred_fallthru
    _
  // Predicated region
  $region22: #{encode.1} parent=0 // pred_check
    _
  $region23: #{encode.1} parent=0 // pred_check_branch
    %196 = sbr.rel (0) target = $region25
  $region24: #{encode.1} parent=0 // pred_region
    _
  $region25: #{encode.1} parent=0 // pred_fallthru
    _
  // Predicated region
  $region26: #{encode.1} parent=0 // pred_check
    _
  $region27: #{encode.1} parent=0 // pred_check_branch
    %198 = sbr.rel (0) target = $region29
  $region28: #{encode.1} parent=0 // pred_region
    _
  $region29: #{encode.1} parent=0 // pred_fallthru
    _
  // Predicated region
  $region30: #{encode.1} parent=0 // pred_check
    _
  $region31: #{encode.1} parent=0 // pred_check_branch
    %200 = sbr.rel (0) target = $region33
  $region32: #{encode.1} parent=0 // pred_region
    _
  $region33: #{encode.1} parent=0 // pred_fallthru
    _

</llo_original>
